<compile_context>
chip_gen: v6e
topology: v6e:2x2x1
jax: 0.10.0
libtpu: 0.0.40
codegen_flags: <defaults>
</compile_context>

<pallas_src>
import functools
import math

import jax
import jax.numpy as jnp
from jax import lax
from jax.experimental import pallas as pl
from jax.experimental.pallas import tpu as pltpu


def _attn_kernel(q_ref, k_ref, v_ref, pos_ref, u_ref, bias_ref, *rest,
                 mask_mode, scale):
    """One grid step == one batch element; heads processed in an in-kernel loop.

    Ref shapes:
      q_ref/k_ref/v_ref : (1, H, D, L)  bf16
      pos_ref           : (D, L)        bf16   positional encoding P (grid-invariant)
      u_ref             : (H, D, 1)     bf16   content bias u (folded into q)
      bias_ref          : (H, L, 1)     f32    precomputed scale * (v - u)^T P key bias
      [mask_ref]        : (L, L)        f32    additive mask, (key, query) layout, 0 / -1e30
      o_ref             : (1, H, D, L)  q.dtype
    """
    if mask_mode == "user":
        mask_ref, o_ref = rest
    else:
        o_ref = rest[0]

    H = q_ref.shape[1]
    L = q_ref.shape[3]

    pos = pos_ref[...]                                     # (D, L) bf16, loop-invariant

    if mask_mode == "causal":
        # additive causal mask in (key j, query i) layout; computed once, reused per head
        jdx = lax.broadcasted_iota(jnp.int32, (L, L), 0)   # key index (sublanes)
        idx = lax.broadcasted_iota(jnp.int32, (L, L), 1)   # query index (lanes)
        neg_t = jnp.where(jdx <= idx, 0.0, -1e30).astype(jnp.float32)

    def head_body(h, carry):
        q_h = q_ref[0, h]                                  # (D, L_i) bf16
        k_h = k_ref[0, h]                                  # (D, L_j) bf16
        v_h = v_ref[0, h]                                  # (D, L_j) bf16
        u_h = u_ref[h]                                     # (D, 1)   bf16
        bias_h = bias_ref[h]                               # (L_j, 1) f32 (pre-scaled)

        # u and 1/sqrt(D) folded into the bf16 MXU LHS (absorbed by the matmul issue).
        q_aug = (q_h + u_h) * scale                        # (D, L_i) bf16
        kp = k_h + pos                                     # (D, L_j) bf16

        # logits^T[j, i] = sum_d kp[d, j] * q_aug[d, i]   (keys on sublanes, queries on lanes)
        logits_t = lax.dot_general(
            kp, q_aug,
            dimension_numbers=(((0,), (0,)), ((), ())),
            preferred_element_type=jnp.float32,
        )                                                  # (L_j, L_i) f32
        logits_t = logits_t + bias_h                       # rank-1 key bias, broadcast over i

        if mask_mode == "causal":
            logits_t = logits_t + neg_t
        elif mask_mode == "user":
            logits_t = logits_t + mask_ref[...]

        # softmax over keys (axis 0); stats land as (1, L_i) rows, normalization deferred
        m = jnp.max(logits_t, axis=0, keepdims=True)       # (1, L_i) f32
        e = jnp.exp(logits_t - m)                          # (L_j, L_i) f32
        s = jnp.sum(e, axis=0, keepdims=True)              # (1, L_i) f32

        # out[d, i] = sum_j v[d, j] * e[j, i]   (plain matmul, bf16 MXU, f32 acc)
        pv = lax.dot_general(
            v_h, e.astype(v_h.dtype),
            dimension_numbers=(((1,), (0,)), ((), ())),
            preferred_element_type=jnp.float32,
        )                                                  # (D, L_i) f32
        out = pv * pl.reciprocal(s)                        # exact recip; only D*L elements
        o_ref[0, h] = out.astype(o_ref.dtype)
        return carry

    lax.fori_loop(0, H, head_body, 0)


def positional_attention(q, k, v, u, v_param, pos_enc, mask=None, *, causal=False):
    """q, k, v: [B, H, D, L]; u, v_param: [H, D]; pos_enc: [D, L].

    mask: optional [L, L] bool user mask (True = attend).  causal=True generates the
    causal mask in-kernel (no mask DMA); it cannot be combined with an explicit mask.
    """
    B, H, D, L = q.shape
    if causal and mask is not None:
        raise ValueError("pass either causal=True or an explicit mask, not both")
    scale = 1.0 / math.sqrt(D)
    cdt = jnp.bfloat16

    # bf16 MXU operands; accumulation & softmax stay f32 inside the kernel.
    q_c = q.astype(cdt)
    k_c = k.astype(cdt)
    v_c = v.astype(cdt)
    pos_c = pos_enc.astype(cdt)
    u_c = u.astype(cdt)[:, :, None]                        # (H, D, 1)

    # 'add' fusion: (q+u)^T k + (q+v)^T P == (q+u)^T (k+P) + (v-u)^T P.
    # The (v-u)^T P key bias is batch/query independent -> hoisted and pre-scaled (tiny).
    bias = jnp.einsum("hd,dl->hl",
                      (v_param - u).astype(jnp.float32),
                      pos_enc.astype(jnp.float32)) * scale
    bias = bias[:, :, None]                                # (H, L, 1) f32

    mask_mode = "causal" if causal else ("user" if mask is not None else "none")
    kernel = functools.partial(_attn_kernel, mask_mode=mask_mode, scale=scale)

    in_specs = [
        pl.BlockSpec((1, H, D, L), lambda b: (b, 0, 0, 0)),   # q
        pl.BlockSpec((1, H, D, L), lambda b: (b, 0, 0, 0)),   # k
        pl.BlockSpec((1, H, D, L), lambda b: (b, 0, 0, 0)),   # v
        pl.BlockSpec((D, L), lambda b: (0, 0)),               # positional encoding
        pl.BlockSpec((H, D, 1), lambda b: (0, 0, 0)),         # u (content bias)
        pl.BlockSpec((H, L, 1), lambda b: (0, 0, 0)),         # pre-scaled (v-u)^T P key bias
    ]
    args = [q_c, k_c, v_c, pos_c, u_c, bias]
    if mask_mode == "user":
        # precomputed additive mask in the in-kernel (key, query) layout (VMEM-resident)
        mask_add_t = jnp.where(mask.T, 0.0, -1e30).astype(jnp.float32)
        in_specs.append(pl.BlockSpec((L, L), lambda b: (0, 0)))
        args.append(mask_add_t)

    return pl.pallas_call(
        kernel,
        out_shape=jax.ShapeDtypeStruct((B, H, D, L), q.dtype),
        grid_spec=pltpu.PrefetchScalarGridSpec(
            num_scalar_prefetch=0,
            grid=(B,),                       # one step per batch; heads looped in-kernel
            in_specs=in_specs,
            out_specs=pl.BlockSpec((1, H, D, L), lambda b: (b, 0, 0, 0)),
        ),
        compiler_params=pltpu.CompilerParams(
            dimension_semantics=("parallel",),   # B >= 2 shards over v7x's 2 TCs
        ),
    )(*args)


def _reference(q, k, v, u, v_param, pos_enc, mask):
    D = q.shape[2]
    content = jnp.einsum("bhdi,bhdj->bhij", q + u[None, :, :, None], k)
    plog = jnp.einsum("bhdi,dj->bhij", q + v_param[None, :, :, None], pos_enc)
    logits = (content + plog) / math.sqrt(D)
    if mask is not None:
        logits = jnp.where(mask[None, None], logits, -jnp.inf)
    attn = jax.nn.softmax(logits, axis=-1)
    return jnp.einsum("bhij,bhdj->bhdi", attn, v)


def _xavier_uniform(key, shape):
    # PyTorch xavier_uniform_ for a 2-D (fan_out, fan_in) tensor
    fan_out, fan_in = shape
    bound = math.sqrt(6.0 / (fan_in + fan_out))
    return jax.random.uniform(key, shape, jnp.float32, -bound, bound)


def _sinusoidal_encoding(head_dim, seq_len):
    # deterministic positional encoding table P[d, j], shape (head_dim, seq_len)
    pos = jnp.arange(seq_len, dtype=jnp.float32)[None, :]           # (1, L)
    i = jnp.arange(head_dim, dtype=jnp.float32)[:, None]            # (D, 1)
    inv_freq = jnp.exp(-(2.0 * jnp.floor(i / 2.0) / head_dim) * math.log(10000.0))
    ang = pos * inv_freq
    return jnp.where((jnp.arange(head_dim)[:, None] % 2) == 0,
                     jnp.sin(ang), jnp.cos(ang)).astype(jnp.float32)


if __name__ == "__main__":
    key = jax.random.PRNGKey(0)
    kq, kk, kv, ku, kvp = jax.random.split(key, 5)

    # model_dim = H * D = 128; global attention: PatchSize == KSeqLen == L (lane-dense 128).
    B, H, D, L = 2, 4, 32, 128
    structure_size = (8, 16)
    assert structure_size[0] * structure_size[1] == L  # mirrors the module's assert

    q = jax.random.normal(kq, (B, H, D, L), jnp.float32)
    k = jax.random.normal(kk, (B, H, D, L), jnp.float32)
    v = jax.random.normal(kv, (B, H, D, L), jnp.float32)

    # nn.Parameter(torch.Tensor(num_heads, head_dim)) + xavier_uniform_ init
    u_param = _xavier_uniform(ku, (H, D))
    v_param = _xavier_uniform(kvp, (H, D))
    pos_enc = _sinusoidal_encoding(D, L)

    # user-supplied mask [SeqLen, SeqLen]: causal
    mask = jnp.tril(jnp.ones((L, L), dtype=bool))

    # Path 1: causal mask generated in-kernel (no (L,L) mask DMA).
    out = jax.block_until_ready(
        positional_attention(q, k, v, u_param, v_param, pos_enc, causal=True))
    # Path 2: arbitrary user mask passed as a precomputed additive f32 mask.
    out_m = jax.block_until_ready(
        positional_attention(q, k, v, u_param, v_param, pos_enc, mask=mask))

    ref = _reference(q, k, v, u_param, v_param, pos_enc, mask)
    assert out.shape == (B, H, D, L)
    # bf16 MXU operands -> looser tolerance vs the pure-f32 reference.
    assert jnp.allclose(out, ref, atol=1e-1, rtol=1e-1), float(jnp.max(jnp.abs(out - ref)))
    assert jnp.allclose(out_m, ref, atol=1e-1, rtol=1e-1), float(jnp.max(jnp.abs(out_m - ref)))
    # Both kernel paths compute identical arithmetic -> must agree tightly.
    assert jnp.allclose(out, out_m, atol=1e-5, rtol=1e-5), float(jnp.max(jnp.abs(out - out_m)))

    print("KERNEL_OK")
</pallas_src>

<mosaic_0001>
module attributes {stable_mosaic.version = 11 : i64} {
  func.func @_attn_kernel(%arg0: i32, %arg1: memref<1x4x32x128xbf16, #tpu.memory_space<vmem>>, %arg2: memref<1x4x32x128xbf16, #tpu.memory_space<vmem>>, %arg3: memref<1x4x32x128xbf16, #tpu.memory_space<vmem>>, %arg4: memref<32x128xbf16, #tpu.memory_space<vmem>>, %arg5: memref<4x32x1xbf16, #tpu.memory_space<vmem>>, %arg6: memref<4x128x1xf32, #tpu.memory_space<vmem>>, %arg7: memref<1x4x32x128xf32, #tpu.memory_space<vmem>>) attributes {dimension_semantics = [#tpu.dimension_semantics<parallel>], iteration_bounds = array<i64: 2>, scalar_prefetch = 0 : i64, scratch_operands = 0 : i64, tpu.core_type = #tpu.core_type<tc>, window_params = [{transform_indices = @transform_0, window_bounds = array<i64: 1, 4, 32, 128>}, {transform_indices = @transform_1, window_bounds = array<i64: 1, 4, 32, 128>}, {transform_indices = @transform_2, window_bounds = array<i64: 1, 4, 32, 128>}, {pipeline_mode = #tpu.pipeline_mode<synchronous>, transform_indices = @transform_3, window_bounds = array<i64: 32, 128>}, {pipeline_mode = #tpu.pipeline_mode<synchronous>, transform_indices = @transform_4, window_bounds = array<i64: 4, 32, 1>}, {pipeline_mode = #tpu.pipeline_mode<synchronous>, transform_indices = @transform_5, window_bounds = array<i64: 4, 128, 1>}, {transform_indices = @transform_6, window_bounds = array<i64: 1, 4, 32, 128>}]} {
    %c0 = arith.constant 0 : index
    %c0_0 = arith.constant 0 : index
    %0 = vector.load %arg4[%c0, %c0_0] : memref<32x128xbf16, #tpu.memory_space<vmem>>, vector<32x128xbf16>
    %1 = tpu.iota {dimensions = array<i32: 0>} : vector<128x128xi32>
    %2 = tpu.iota {dimensions = array<i32: 1>} : vector<128x128xi32>
    %3 = arith.cmpi sle, %1, %2 : vector<128x128xi32>
    %cst = arith.constant 0.000000e+00 : f32
    %cst_1 = arith.constant -1.000000e+30 : f32
    %4 = vector.broadcast %cst : f32 to vector<128x128xf32>
    %5 = vector.broadcast %cst_1 : f32 to vector<128x128xf32>
    %6 = arith.select %3, %4, %5 : vector<128x128xi1>, vector<128x128xf32>
    %c0_i32 = arith.constant 0 : i32
    %c4_i32 = arith.constant 4 : i32
    %7 = arith.addi %c0_i32, %c4_i32 : i32
    %c1_i32 = arith.constant 1 : i32
    scf.for %arg8 = %c0_i32 to %7 step %c1_i32  : i32 {
      %c0_3 = arith.constant 0 : index
      %8 = arith.index_cast %arg8 : i32 to index
      %c0_4 = arith.constant 0 : index
      %c0_5 = arith.constant 0 : index
      %9 = vector.load %arg1[%c0_3, %8, %c0_4, %c0_5] : memref<1x4x32x128xbf16, #tpu.memory_space<vmem>>, vector<1x1x32x128xbf16>
      %10 = vector.shape_cast %9 : vector<1x1x32x128xbf16> to vector<32x128xbf16>
      %c0_6 = arith.constant 0 : index
      %11 = arith.index_cast %arg8 : i32 to index
      %c0_7 = arith.constant 0 : index
      %c0_8 = arith.constant 0 : index
      %12 = vector.load %arg2[%c0_6, %11, %c0_7, %c0_8] : memref<1x4x32x128xbf16, #tpu.memory_space<vmem>>, vector<1x1x32x128xbf16>
      %13 = vector.shape_cast %12 : vector<1x1x32x128xbf16> to vector<32x128xbf16>
      %c0_9 = arith.constant 0 : index
      %14 = arith.index_cast %arg8 : i32 to index
      %c0_10 = arith.constant 0 : index
      %c0_11 = arith.constant 0 : index
      %15 = vector.load %arg3[%c0_9, %14, %c0_10, %c0_11] : memref<1x4x32x128xbf16, #tpu.memory_space<vmem>>, vector<1x1x32x128xbf16>
      %16 = vector.shape_cast %15 : vector<1x1x32x128xbf16> to vector<32x128xbf16>
      %17 = arith.index_cast %arg8 : i32 to index
      %c0_12 = arith.constant 0 : index
      %c0_13 = arith.constant 0 : index
      %18 = vector.load %arg5[%17, %c0_12, %c0_13] : memref<4x32x1xbf16, #tpu.memory_space<vmem>>, vector<1x32x1xbf16>
      %19 = vector.shape_cast %18 : vector<1x32x1xbf16> to vector<32x1xbf16>
      %20 = arith.index_cast %arg8 : i32 to index
      %c0_14 = arith.constant 0 : index
      %c0_15 = arith.constant 0 : index
      %21 = vector.load %arg6[%20, %c0_14, %c0_15] : memref<4x128x1xf32, #tpu.memory_space<vmem>>, vector<1x128x1xf32>
      %22 = vector.shape_cast %21 : vector<1x128x1xf32> to vector<128x1xf32>
      %23 = vector.broadcast %19 : vector<32x1xbf16> to vector<32x128xbf16>
      %24 = arith.addf %10, %23 : vector<32x128xbf16>
      %cst_16 = arith.constant 1.767580e-01 : bf16
      %25 = vector.broadcast %cst_16 : bf16 to vector<32x128xbf16>
      %26 = arith.mulf %24, %25 : vector<32x128xbf16>
      %27 = arith.addf %13, %0 : vector<32x128xbf16>
      %cst_17 = arith.constant dense<0.000000e+00> : vector<128x128xf32>
      %28 = tpu.matmul %27, %26, %cst_17 {dimension_numbers = #tpu.dot_dimension_numbers<[0], [0], [1], [1], [0, 1, 1, 1], [], []>} : vector<32x128xbf16>, vector<32x128xbf16>, vector<128x128xf32> -> vector<128x128xf32>
      %29 = vector.broadcast %22 : vector<128x1xf32> to vector<128x128xf32>
      %30 = arith.addf %28, %29 : vector<128x128xf32>
      %31 = arith.addf %30, %6 : vector<128x128xf32>
      %cst_18 = arith.constant dense<0xFF800000> : vector<128xf32>
      %32 = vector.multi_reduction <maximumf>, %31, %cst_18 [0] : vector<128x128xf32> to vector<128xf32>
      %33 = vector.shape_cast %32 : vector<128xf32> to vector<1x128xf32>
      %34 = vector.broadcast %33 : vector<1x128xf32> to vector<128x128xf32>
      %35 = arith.subf %31, %34 : vector<128x128xf32>
      %36 = math.exp %35 : vector<128x128xf32>
      %cst_19 = arith.constant dense<0.000000e+00> : vector<128xf32>
      %37 = vector.multi_reduction <add>, %36, %cst_19 [0] : vector<128x128xf32> to vector<128xf32>
      %38 = vector.shape_cast %37 : vector<128xf32> to vector<1x128xf32>
      %39 = arith.truncf %36 : vector<128x128xf32> to vector<128x128xbf16>
      %cst_20 = arith.constant dense<0.000000e+00> : vector<32x128xf32>
      %40 = tpu.matmul %16, %39, %cst_20 {dimension_numbers = #tpu.dot_dimension_numbers<[1], [0], [0], [1], [0, 0, 1, 1], [], []>} : vector<32x128xbf16>, vector<128x128xbf16>, vector<32x128xf32> -> vector<32x128xf32>
      %41 = tpu.reciprocal %38 : vector<1x128xf32> -> vector<1x128xf32>
      %42 = vector.broadcast %41 : vector<1x128xf32> to vector<32x128xf32>
      %43 = arith.mulf %40, %42 : vector<32x128xf32>
      %c0_21 = arith.constant 0 : index
      %44 = arith.index_cast %arg8 : i32 to index
      %c0_22 = arith.constant 0 : index
      %c0_23 = arith.constant 0 : index
      %45 = vector.load %arg7[%c0_21, %44, %c0_22, %c0_23] : memref<1x4x32x128xf32, #tpu.memory_space<vmem>>, vector<1x1x32x128xf32>
      %46 = vector.shape_cast %45 : vector<1x1x32x128xf32> to vector<32x128xf32>
      %47 = vector.shape_cast %43 : vector<32x128xf32> to vector<1x1x32x128xf32>
      tpu.vector_store %arg7[%c0_21, %44, %c0_22, %c0_23], %47 {strides = array<i32>} : memref<1x4x32x128xf32, #tpu.memory_space<vmem>>, vector<1x1x32x128xf32>,
    }
    %c4_i32_2 = arith.constant 4 : i32
    return
  }
  func.func @transform_0(%arg0: i32) -> (i32, i32, i32, i32) {
    %c0_i32 = arith.constant 0 : i32
    %c0_i32_0 = arith.constant 0 : i32
    %c0_i32_1 = arith.constant 0 : i32
    %c0_i32_2 = arith.constant 0 : i32
    return %arg0, %c0_i32, %c0_i32_0, %c0_i32_1 : i32, i32, i32, i32
  }
  func.func @transform_1(%arg0: i32) -> (i32, i32, i32, i32) {
    %c0_i32 = arith.constant 0 : i32
    %c0_i32_0 = arith.constant 0 : i32
    %c0_i32_1 = arith.constant 0 : i32
    %c0_i32_2 = arith.constant 0 : i32
    return %arg0, %c0_i32, %c0_i32_0, %c0_i32_1 : i32, i32, i32, i32
  }
  func.func @transform_2(%arg0: i32) -> (i32, i32, i32, i32) {
    %c0_i32 = arith.constant 0 : i32
    %c0_i32_0 = arith.constant 0 : i32
    %c0_i32_1 = arith.constant 0 : i32
    %c0_i32_2 = arith.constant 0 : i32
    return %arg0, %c0_i32, %c0_i32_0, %c0_i32_1 : i32, i32, i32, i32
  }
  func.func @transform_3(%arg0: i32) -> (i32, i32) {
    %c0_i32 = arith.constant 0 : i32
    %c0_i32_0 = arith.constant 0 : i32
    %c0_i32_1 = arith.constant 0 : i32
    return %c0_i32, %c0_i32_0 : i32, i32
  }
  func.func @transform_4(%arg0: i32) -> (i32, i32, i32) {
    %c0_i32 = arith.constant 0 : i32
    %c0_i32_0 = arith.constant 0 : i32
    %c0_i32_1 = arith.constant 0 : i32
    %c0_i32_2 = arith.constant 0 : i32
    return %c0_i32, %c0_i32_0, %c0_i32_1 : i32, i32, i32
  }
  func.func @transform_5(%arg0: i32) -> (i32, i32, i32) {
    %c0_i32 = arith.constant 0 : i32
    %c0_i32_0 = arith.constant 0 : i32
    %c0_i32_1 = arith.constant 0 : i32
    %c0_i32_2 = arith.constant 0 : i32
    return %c0_i32, %c0_i32_0, %c0_i32_1 : i32, i32, i32
  }
  func.func @transform_6(%arg0: i32) -> (i32, i32, i32, i32) {
    %c0_i32 = arith.constant 0 : i32
    %c0_i32_0 = arith.constant 0 : i32
    %c0_i32_1 = arith.constant 0 : i32
    %c0_i32_2 = arith.constant 0 : i32
    return %arg0, %c0_i32, %c0_i32_0, %c0_i32_1 : i32, i32, i32, i32
  }
}

</mosaic_0001>

<llo_original>
// kernel: tpu_custom_call.1
$region0: #{tpu_custom_call.1}
  #allocation0 [shape = 'u32[]', space=smem, size = 0x4, offset = 0x4, fixed_abs, tag = 'smem constant byte address 0x4 - core index']
  #allocation1 [shape = 'u32[144,128]{1,0:T(1,128)}', space=vmem, size = 0x12000, scoped, tag = 'internal scratch']
  %s0 = inlined_call_operand.vmem [shape: bf16[2,4,32,128], index: 0, kind: input, shape index: {}]
  %s1 = inlined_call_operand.vmem [shape: bf16[2,4,32,128], index: 1, kind: input, shape index: {}]
  %s2 = inlined_call_operand.vmem [shape: bf16[2,4,32,128], index: 2, kind: input, shape index: {}]
  %s3 = inlined_call_operand.vmem [shape: bf16[32,128], index: 3, kind: input, shape index: {}]
  %s4 = inlined_call_operand.vmem [shape: bf16[4,32,1], index: 4, kind: input, shape index: {}]
  %s5 = inlined_call_operand.vmem [shape: f32[4,128,1], index: 5, kind: input, shape index: {}]
  %s6 = inlined_call_operand.hbm [shape: f32[2,4,32,128], index: 6, kind: output, shape index: {}]
  %s7 = sld [smem:[#allocation0]]
  $region64: #{tpu_custom_call.1} parent=0
    _
  %s9 = ssub.s32 1, %s7
  %s10 = scalar_select 0, %s9, %s7
  $region1: #{tpu_custom_call.1} parent=0
    #allocation2 [shape = 'u8[131072]{0}', space=vmem, size = 0x20000, scoped, tag = 'output window, operand 0']
    #allocation3 [shape = 's32[2]{0}', space=sflag, size = 0x8, scoped, tag = 'scoped memory for tpu_custom_call.1']
    %11 = vsyncpa [#allocation3], 0
    %s12 = scalar_lea.sflag [#allocation3], 1
    %13 = vsyncpa %s12, 0
    loop: start=0, step=1, limit=4
    $region2: #{tpu_custom_call.1} parent=1 // loop_pre_header
      _
    $region3: #{tpu_custom_call.1} parent=1 // loop_header
      %s15 = sphi 0, %s19
      %p16 = scmp.ge.s32.totalorder %s15, 4
      %s25 = sphi 0, %s27
      %s28 = sphi 0, %s25
      %s29 = sphi 0, %s28
      %s45 = sphi 0, %s29
      %s51 = sphi 0, %s53
      %s54 = sphi 0, %s51
      %s55 = sphi 0, %s54
      %s71 = sphi 0, %s55
      %s77 = sphi 0, %s79
      %s80 = sphi 0, %s77
      %s81 = sphi 0, %s80
      %s97 = sphi 0, %s81
      %s101 = sphi 0, %s101
      %s103 = sphi 0, %s101
      %s104 = sphi 0, %s103
      %s118 = sphi 0, %s104
      %s122 = sphi 0, %s122
      %s124 = sphi 0, %s122
      %s125 = sphi 0, %s124
      %s139 = sphi 0, %s125
      %s143 = sphi 0, %s143
      %s145 = sphi 0, %s143
      %s146 = sphi 0, %s145
      %s160 = sphi 0, %s146
      %s166 = sphi 0, %s168
      %s169 = sphi 0, %s166
      %s170 = sphi 0, %s169
      %s186 = sphi 0, %s170
    $region4: #{tpu_custom_call.1} parent=1 // loop_header_branch
      %18 = sbr.rel (%p16) target = $region8
    $region5: #{tpu_custom_call.1} parent=1 // loop_body
      %s20 = ssub.s32 %s15, 1
      %s21 = ssub.s32 %s15, 2
      %s22 = sadd.s32 %s15, 1
      %s23 = ssub.s32 %s15, %s22
      %p24 = scmp.eq.s32.totalorder %s23, 0
      %s26 = sadd.s32 %s25, 1
      %s27 = scalar_select %p24, %s25, %s26
      %p30 = pneg %p24
      %p31 = scmp.eq.s32.totalorder %s15, 1
      %p32 = por %p30, %p31
      %p33 = scmp.ne.s32.totalorder %s25, %s28
      %p34 = scmp.eq.s32.totalorder %s15, 0
      %p35 = por %p33, %p34
      %p36 = scmp.ne.s32.totalorder %s25, %s28
      %p37 = scmp.eq.s32.totalorder %s20, 1
      %p38 = por %p36, %p37
      %p39 = scmp.ne.s32.totalorder %s28, %s29
      %p40 = scmp.eq.s32.totalorder %s20, 0
      %p41 = por %p39, %p40
      %p42 = scmp.ne.s32.totalorder %s28, %s29
      %p43 = scmp.eq.s32.totalorder %s21, 1
      %p44 = por %p42, %p43
      %p46 = scmp.ne.s32.totalorder %s29, %s45
      %p47 = scmp.eq.s32.totalorder %s21, 0
      %p48 = por %p46, %p47
      %s49 = ssub.s32 %s15, %s22
      %p50 = scmp.eq.s32.totalorder %s49, 0
      %s52 = sadd.s32 %s51, 1
      %s53 = scalar_select %p50, %s51, %s52
      %p56 = pneg %p50
      %p57 = scmp.eq.s32.totalorder %s15, 1
      %p58 = por %p56, %p57
      %p59 = scmp.ne.s32.totalorder %s51, %s54
      %p60 = scmp.eq.s32.totalorder %s15, 0
      %p61 = por %p59, %p60
      %p62 = scmp.ne.s32.totalorder %s51, %s54
      %p63 = scmp.eq.s32.totalorder %s20, 1
      %p64 = por %p62, %p63
      %p65 = scmp.ne.s32.totalorder %s54, %s55
      %p66 = scmp.eq.s32.totalorder %s20, 0
      %p67 = por %p65, %p66
      %p68 = scmp.ne.s32.totalorder %s54, %s55
      %p69 = scmp.eq.s32.totalorder %s21, 1
      %p70 = por %p68, %p69
      %p72 = scmp.ne.s32.totalorder %s55, %s71
      %p73 = scmp.eq.s32.totalorder %s21, 0
      %p74 = por %p72, %p73
      %s75 = ssub.s32 %s15, %s22
      %p76 = scmp.eq.s32.totalorder %s75, 0
      %s78 = sadd.s32 %s77, 1
      %s79 = scalar_select %p76, %s77, %s78
      %p82 = pneg %p76
      %p83 = scmp.eq.s32.totalorder %s15, 1
      %p84 = por %p82, %p83
      %p85 = scmp.ne.s32.totalorder %s77, %s80
      %p86 = scmp.eq.s32.totalorder %s15, 0
      %p87 = por %p85, %p86
      %p88 = scmp.ne.s32.totalorder %s77, %s80
      %p89 = scmp.eq.s32.totalorder %s20, 1
      %p90 = por %p88, %p89
      %p91 = scmp.ne.s32.totalorder %s80, %s81
      %p92 = scmp.eq.s32.totalorder %s20, 0
      %p93 = por %p91, %p92
      %p94 = scmp.ne.s32.totalorder %s80, %s81
      %p95 = scmp.eq.s32.totalorder %s21, 1
      %p96 = por %p94, %p95
      %p98 = scmp.ne.s32.totalorder %s81, %s97
      %p99 = scmp.eq.s32.totalorder %s21, 0
      %p100 = por %p98, %p99
      %s102 = sadd.s32 %s101, 1
      %p105 = scmp.eq.s32.totalorder %s15, 1
      %p106 = scmp.ne.s32.totalorder %s101, %s103
      %p107 = scmp.eq.s32.totalorder %s15, 0
      %p108 = por %p106, %p107
      %p109 = scmp.ne.s32.totalorder %s101, %s103
      %p110 = scmp.eq.s32.totalorder %s20, 1
      %p111 = por %p109, %p110
      %p112 = scmp.ne.s32.totalorder %s103, %s104
      %p113 = scmp.eq.s32.totalorder %s20, 0
      %p114 = por %p112, %p113
      %p115 = scmp.ne.s32.totalorder %s103, %s104
      %p116 = scmp.eq.s32.totalorder %s21, 1
      %p117 = por %p115, %p116
      %p119 = scmp.ne.s32.totalorder %s104, %s118
      %p120 = scmp.eq.s32.totalorder %s21, 0
      %p121 = por %p119, %p120
      %s123 = sadd.s32 %s122, 1
      %p126 = scmp.eq.s32.totalorder %s15, 1
      %p127 = scmp.ne.s32.totalorder %s122, %s124
      %p128 = scmp.eq.s32.totalorder %s15, 0
      %p129 = por %p127, %p128
      %p130 = scmp.ne.s32.totalorder %s122, %s124
      %p131 = scmp.eq.s32.totalorder %s20, 1
      %p132 = por %p130, %p131
      %p133 = scmp.ne.s32.totalorder %s124, %s125
      %p134 = scmp.eq.s32.totalorder %s20, 0
      %p135 = por %p133, %p134
      %p136 = scmp.ne.s32.totalorder %s124, %s125
      %p137 = scmp.eq.s32.totalorder %s21, 1
      %p138 = por %p136, %p137
      %p140 = scmp.ne.s32.totalorder %s125, %s139
      %p141 = scmp.eq.s32.totalorder %s21, 0
      %p142 = por %p140, %p141
      %s144 = sadd.s32 %s143, 1
      %p147 = scmp.eq.s32.totalorder %s15, 1
      %p148 = scmp.ne.s32.totalorder %s143, %s145
      %p149 = scmp.eq.s32.totalorder %s15, 0
      %p150 = por %p148, %p149
      %p151 = scmp.ne.s32.totalorder %s143, %s145
      %p152 = scmp.eq.s32.totalorder %s20, 1
      %p153 = por %p151, %p152
      %p154 = scmp.ne.s32.totalorder %s145, %s146
      %p155 = scmp.eq.s32.totalorder %s20, 0
      %p156 = por %p154, %p155
      %p157 = scmp.ne.s32.totalorder %s145, %s146
      %p158 = scmp.eq.s32.totalorder %s21, 1
      %p159 = por %p157, %p158
      %p161 = scmp.ne.s32.totalorder %s146, %s160
      %p162 = scmp.eq.s32.totalorder %s21, 0
      %p163 = por %p161, %p162
      %s164 = ssub.s32 %s15, %s22
      %p165 = scmp.eq.s32.totalorder %s164, 0
      %s167 = sadd.s32 %s166, 1
      %s168 = scalar_select %p165, %s166, %s167
      %p171 = pneg %p165
      %p172 = scmp.eq.s32.totalorder %s15, 1
      %p173 = por %p171, %p172
      %p174 = scmp.ne.s32.totalorder %s166, %s169
      %p175 = scmp.eq.s32.totalorder %s15, 0
      %p176 = por %p174, %p175
      %p177 = scmp.ne.s32.totalorder %s166, %s169
      %p178 = scmp.eq.s32.totalorder %s20, 1
      %p179 = por %p177, %p178
      %p180 = scmp.ne.s32.totalorder %s169, %s170
      %p181 = scmp.eq.s32.totalorder %s20, 0
      %p182 = por %p180, %p181
      %p183 = scmp.ne.s32.totalorder %s169, %s170
      %p184 = scmp.eq.s32.totalorder %s21, 1
      %p185 = por %p183, %p184
      %p187 = scmp.ne.s32.totalorder %s170, %s186
      %p188 = scmp.eq.s32.totalorder %s21, 0
      %p189 = por %p187, %p188
      %p190 = scmp.le.s32.totalorder 1, %s15
      %p191 = scmp.lt.s32.totalorder %s15, 3
      %p192 = pnand %p190, %p191
      %p193 = pneg %p192
      // Predicated region
      $region9: #{tpu_custom_call.1} parent=5 // pred_check
        _
      $region10: #{tpu_custom_call.1} parent=5 // pred_check_branch
        %195 = sbr.rel (%p192) target = $region12
      $region11: #{tpu_custom_call.1} parent=5 // pred_region
        %s196 = ssub.s32 %s15, 1
        // Predicated region
        $region13: #{tpu_custom_call.1} parent=11 // pred_check
          %p197 = pneg %p114
        $region14: #{tpu_custom_call.1} parent=11 // pred_check_branch
          %199 = sbr.rel (%p197) target = $region16
        $region15: #{tpu_custom_call.1} parent=11 // pred_region
          _
        $region16: #{tpu_custom_call.1} parent=11 // pred_fallthru
          _
        // Predicated region
        $region17: #{tpu_custom_call.1} parent=11 // pred_check
          %p200 = pneg %p135
        $region18: #{tpu_custom_call.1} parent=11 // pred_check_branch
          %202 = sbr.rel (%p200) target = $region20
        $region19: #{tpu_custom_call.1} parent=11 // pred_region
          _
        $region20: #{tpu_custom_call.1} parent=11 // pred_fallthru
          _
        // Predicated region
        $region21: #{tpu_custom_call.1} parent=11 // pred_check
          %p203 = pneg %p156
        $region22: #{tpu_custom_call.1} parent=11 // pred_check_branch
          %205 = sbr.rel (%p203) target = $region24
        $region23: #{tpu_custom_call.1} parent=11 // pred_region
          _
        $region24: #{tpu_custom_call.1} parent=11 // pred_fallthru
          _
      $region12: #{tpu_custom_call.1} parent=5 // pred_fallthru
        _
      %p206 = scmp.lt.s32.totalorder %s15, 2
      // Predicated region
      $region25: #{tpu_custom_call.1} parent=5 // pred_check
        %p207 = pneg %p206
      $region26: #{tpu_custom_call.1} parent=5 // pred_check_branch
        %209 = sbr.rel (%p207) target = $region28
      $region27: #{tpu_custom_call.1} parent=5 // pred_region
        // Predicated region
        $region29: #{tpu_custom_call.1} parent=27 // pred_check
          %p210 = pneg %p35
        $region30: #{tpu_custom_call.1} parent=27 // pred_check_branch
          %212 = sbr.rel (%p210) target = $region32
        $region31: #{tpu_custom_call.1} parent=27 // pred_region
          %p213 = scmp.lt.s32.totalorder %s15, 1
          %s214 = scalar_select %p213, %s15, 1
          %s215 = smul.addr %s214, 16
          %s216 = smul.addr %s215, 4
          %s217 = scalar_lea.vmem %s0, %s216
        $region32: #{tpu_custom_call.1} parent=27 // pred_fallthru
          _
        // Predicated region
        $region33: #{tpu_custom_call.1} parent=27 // pred_check
          %p218 = pneg %p61
        $region34: #{tpu_custom_call.1} parent=27 // pred_check_branch
          %220 = sbr.rel (%p218) target = $region36
        $region35: #{tpu_custom_call.1} parent=27 // pred_region
          %p221 = scmp.lt.s32.totalorder %s15, 1
          %s222 = scalar_select %p221, %s15, 1
          %s223 = smul.addr %s222, 16
          %s224 = smul.addr %s223, 4
          %s225 = scalar_lea.vmem %s1, %s224
        $region36: #{tpu_custom_call.1} parent=27 // pred_fallthru
          _
        // Predicated region
        $region37: #{tpu_custom_call.1} parent=27 // pred_check
          %p226 = pneg %p87
        $region38: #{tpu_custom_call.1} parent=27 // pred_check_branch
          %228 = sbr.rel (%p226) target = $region40
        $region39: #{tpu_custom_call.1} parent=27 // pred_region
          %p229 = scmp.lt.s32.totalorder %s15, 1
          %s230 = scalar_select %p229, %s15, 1
          %s231 = smul.addr %s230, 16
          %s232 = smul.addr %s231, 4
          %s233 = scalar_lea.vmem %s2, %s232
        $region40: #{tpu_custom_call.1} parent=27 // pred_fallthru
          _
      $region28: #{tpu_custom_call.1} parent=5 // pred_fallthru
        _
      %p234 = scmp.le.s32.totalorder 1, %s15
      %p235 = scmp.lt.s32.totalorder %s15, 3
      %p236 = pnand %p234, %p235
      %p237 = pneg %p236
      // Predicated region
      $region41: #{tpu_custom_call.1} parent=5 // pred_check
        _
      $region42: #{tpu_custom_call.1} parent=5 // pred_check_branch
        %239 = sbr.rel (%p236) target = $region44
      $region43: #{tpu_custom_call.1} parent=5 // pred_region
        %s240 = ssub.s32 %s15, 1
        %p241 = scmp.lt.s32.totalorder %s20, 1
        %s242 = scalar_select %p241, %s20, 1
        %s243 = smul.addr %s242, 16
        %s244 = smul.addr %s243, 4
        %s245 = scalar_lea.vmem %s0, %s244
        %p246 = pneg %p41
        %p247 = pneg %p38
        %p248 = scmp.lt.s32.totalorder %s20, 1
        %s249 = scalar_select %p248, %s20, 1
        %s250 = smul.addr %s249, 16
        %s251 = smul.addr %s250, 4
        %s252 = scalar_lea.vmem %s1, %s251
        %p253 = pneg %p67
        %p254 = pneg %p64
        %p255 = scmp.lt.s32.totalorder %s20, 1
        %s256 = scalar_select %p255, %s20, 1
        %s257 = smul.addr %s256, 16
        %s258 = smul.addr %s257, 4
        %s259 = scalar_lea.vmem %s2, %s258
        %p260 = pneg %p93
        %p261 = pneg %p90
        %p262 = pneg %p114
        %p263 = pneg %p111
        %p264 = pneg %p135
        %p265 = pneg %p132
        %p266 = pneg %p156
        %p267 = pneg %p153
        %p268 = pneg %p182
        %p269 = pneg %p179
        %s270 = sand.u32 %s169, 1
        %s271 = scalar_lea.sflag [#allocation3], %s270
        %s272 = sand.u32 %s169, 1
        %s273 = smul.addr %s272, 128
        %s274 = scalar_lea.vmem [#allocation2], %s273
        %p275 = scmp.lt.s32.totalorder %s20, 1
        %s276 = scalar_select %p275, %s20, 1
        %s277 = smul.addr %s276, 16
        %s278 = smul.addr %s277, 4
        %s279 = scalar_lea.vmem %s0, %s278
        %p280 = scmp.lt.s32.totalorder %s20, 1
        %s281 = scalar_select %p280, %s20, 1
        %s282 = smul.addr %s281, 16
        %s283 = smul.addr %s282, 4
        %s284 = scalar_lea.vmem %s1, %s283
        %p285 = scmp.lt.s32.totalorder %s20, 1
        %s286 = scalar_select %p285, %s20, 1
        %s287 = smul.addr %s286, 16
        %s288 = smul.addr %s287, 4
        %s289 = scalar_lea.vmem %s2, %s288
        %v292 = vld [vmem:[%s3] sm:$0xf]
        %v293 = vld [vmem:[%s3 + $0x4] sm:$0xf]
        %v294 = vld [vmem:[%s3 + $0x8] sm:$0xf]
        %v295 = vld [vmem:[%s3 + $0xc] sm:$0xf]
        %v296 = vlaneseq
        %v297 = vshrl.u32 %v296, 7
        %v298 = vadd.s32 %v297, 8
        %v299 = vadd.s32 %v297, 16
        %v300 = vadd.s32 %v297, 24
        %v301 = vadd.s32 %v297, 32
        %v302 = vadd.s32 %v297, 40
        %v303 = vadd.s32 %v297, 48
        %v304 = vadd.s32 %v297, 56
        %v305 = vadd.s32 %v297, 64
        %v306 = vadd.s32 %v297, 72
        %v307 = vadd.s32 %v297, 80
        %v308 = vadd.s32 %v297, 88
        %v309 = vadd.s32 %v297, 96
        %v310 = vadd.s32 %v297, 104
        %v311 = vadd.s32 %v297, 112
        %v312 = vadd.s32 %v297, 120
        %v313 = vlaneseq
        %v314 = vand.u32 %v313, 127
        %vm315 = vcmp.le.s32.totalorder %v297, %v314
        %vm316 = vcmp.le.s32.totalorder %v298, %v314
        %vm317 = vcmp.le.s32.totalorder %v299, %v314
        %vm318 = vcmp.le.s32.totalorder %v300, %v314
        %vm319 = vcmp.le.s32.totalorder %v301, %v314
        %vm320 = vcmp.le.s32.totalorder %v302, %v314
        %vm321 = vcmp.le.s32.totalorder %v303, %v314
        %vm322 = vcmp.le.s32.totalorder %v304, %v314
        %vm323 = vcmp.le.s32.totalorder %v305, %v314
        %vm324 = vcmp.le.s32.totalorder %v306, %v314
        %vm325 = vcmp.le.s32.totalorder %v307, %v314
        %vm326 = vcmp.le.s32.totalorder %v308, %v314
        %vm327 = vcmp.le.s32.totalorder %v309, %v314
        %vm328 = vcmp.le.s32.totalorder %v310, %v314
        %vm329 = vcmp.le.s32.totalorder %v311, %v314
        %vm330 = vcmp.le.s32.totalorder %v312, %v314
        %v331 = vsel %vm315, 0.0, -1e+30
        %v332 = vsel %vm316, 0.0, -1e+30
        %v333 = vsel %vm317, 0.0, -1e+30
        %v334 = vsel %vm318, 0.0, -1e+30
        %v335 = vsel %vm319, 0.0, -1e+30
        %v336 = vsel %vm320, 0.0, -1e+30
        %v337 = vsel %vm321, 0.0, -1e+30
        %v338 = vsel %vm322, 0.0, -1e+30
        %v339 = vsel %vm323, 0.0, -1e+30
        %v340 = vsel %vm324, 0.0, -1e+30
        %v341 = vsel %vm325, 0.0, -1e+30
        %v342 = vsel %vm326, 0.0, -1e+30
        %v343 = vsel %vm327, 0.0, -1e+30
        %v344 = vsel %vm328, 0.0, -1e+30
        %v345 = vsel %vm329, 0.0, -1e+30
        %v346 = vsel %vm330, 0.0, -1e+30
        loop: start=0, step=1, limit=4
        $region45: #{tpu_custom_call.1} parent=43 // loop_pre_header
          _
        $region46: #{tpu_custom_call.1} parent=43 // loop_header
          %s348 = sphi 0, %s352
          %p349 = scmp.ge.s32.totalorder %s348, 4
        $region47: #{tpu_custom_call.1} parent=43 // loop_header_branch
          %351 = sbr.rel (%p349) target = $region51
        $region48: #{tpu_custom_call.1} parent=43 // loop_body
          %s353 = smul.u32 %s348, 4
          %s354 = smul.addr %s353, 4
          %s355 = scalar_lea.vmem %s279, %s354
          %v356 = vld [vmem:[%s355] sm:$0xf]
          %v357 = vld [vmem:[%s355 + $0x4] sm:$0xf]
          %v358 = vld [vmem:[%s355 + $0x8] sm:$0xf]
          %v359 = vld [vmem:[%s355 + $0xc] sm:$0xf]
          %s360 = smul.addr %s353, 4
          %s361 = scalar_lea.vmem %s284, %s360
          %v362 = vld [vmem:[%s361] sm:$0xf]
          %v363 = vld [vmem:[%s361 + $0x4] sm:$0xf]
          %v364 = vld [vmem:[%s361 + $0x8] sm:$0xf]
          %v365 = vld [vmem:[%s361 + $0xc] sm:$0xf]
          %s366 = smul.addr %s353, 4
          %s367 = scalar_lea.vmem %s289, %s366
          %v368 = vld [vmem:[%s367] sm:$0xf]
          %v369 = vld [vmem:[%s367 + $0x4] sm:$0xf]
          %v370 = vld [vmem:[%s367 + $0x8] sm:$0xf]
          %v371 = vld [vmem:[%s367 + $0xc] sm:$0xf]
          %s372 = smul.addr %s353, 4
          %s373 = scalar_lea.vmem %s4, %s372
          %v374 = vld [vmem:[%s373] sm:$0xf]
          %v375 = vld [vmem:[%s373 + $0x4] sm:$0xf]
          %v376 = vld [vmem:[%s373 + $0x8] sm:$0xf]
          %v377 = vld [vmem:[%s373 + $0xc] sm:$0xf]
          %s378 = smul.u32 %s348, 128
          %s379 = scalar_lea.vmem %s5, %s378
          %v380 = vld [vmem:[%s379] sm:$0xff]
          %v381 = vld [vmem:[%s379 + $0x8] sm:$0xff]
          %v382 = vld [vmem:[%s379 + $0x10] sm:$0xff]
          %v383 = vld [vmem:[%s379 + $0x18] sm:$0xff]
          %v384 = vld [vmem:[%s379 + $0x20] sm:$0xff]
          %v385 = vld [vmem:[%s379 + $0x28] sm:$0xff]
          %v386 = vld [vmem:[%s379 + $0x30] sm:$0xff]
          %v387 = vld [vmem:[%s379 + $0x38] sm:$0xff]
          %v388 = vld [vmem:[%s379 + $0x40] sm:$0xff]
          %v389 = vld [vmem:[%s379 + $0x48] sm:$0xff]
          %v390 = vld [vmem:[%s379 + $0x50] sm:$0xff]
          %v391 = vld [vmem:[%s379 + $0x58] sm:$0xff]
          %v392 = vld [vmem:[%s379 + $0x60] sm:$0xff]
          %v393 = vld [vmem:[%s379 + $0x68] sm:$0xff]
          %v394 = vld [vmem:[%s379 + $0x70] sm:$0xff]
          %v395 = vld [vmem:[%s379 + $0x78] sm:$0xff]
          %397 = vset.pattern.permute.xlu0 0
          %398 = vperm.xlu0 %397, %v374
          %v399 = vpop.permute.xlu0 %398
          %v402 = vunpack.c.l.s4 839922192
          %v403 = vunpack.c.0.s8 %v402
          %v404 = vlaneseq
          %v405 = vshrl.u32 %v404, 7
          %v406 = vsub.s32 %v403, %v405
          %v407 = vrot.slane %v399, %v406
          %409 = vset.pattern.permute.xlu0 0
          %410 = vperm.xlu0 %409, %v375
          %v411 = vpop.permute.xlu0 %410
          %v414 = vunpack.c.l.s4 839922192
          %v415 = vunpack.c.0.s8 %v414
          %v416 = vlaneseq
          %v417 = vshrl.u32 %v416, 7
          %v418 = vsub.s32 %v415, %v417
          %v419 = vrot.slane %v411, %v418
          %421 = vset.pattern.permute.xlu0 0
          %422 = vperm.xlu0 %421, %v376
          %v423 = vpop.permute.xlu0 %422
          %v426 = vunpack.c.l.s4 839922192
          %v427 = vunpack.c.0.s8 %v426
          %v428 = vlaneseq
          %v429 = vshrl.u32 %v428, 7
          %v430 = vsub.s32 %v427, %v429
          %v431 = vrot.slane %v423, %v430
          %433 = vset.pattern.permute.xlu0 0
          %434 = vperm.xlu0 %433, %v377
          %v435 = vpop.permute.xlu0 %434
          %v438 = vunpack.c.l.s4 839922192
          %v439 = vunpack.c.0.s8 %v438
          %v440 = vlaneseq
          %v441 = vshrl.u32 %v440, 7
          %v442 = vsub.s32 %v439, %v441
          %v443 = vrot.slane %v435, %v442
          %v444 = vadd.bf16 %v356, %v407
          %v445 = vadd.bf16 %v357, %v419
          %v446 = vadd.bf16 %v358, %v431
          %v447 = vadd.bf16 %v359, %v443
          %v448 = vmul.bf16 %v444, 1043676725
          %v449 = vmul.bf16 %v445, 1043676725
          %v450 = vmul.bf16 %v446, 1043676725
          %v451 = vmul.bf16 %v447, 1043676725
          %v452 = vadd.bf16 %v362, %v292
          %v453 = vadd.bf16 %v363, %v293
          %v454 = vadd.bf16 %v364, %v294
          %v455 = vadd.bf16 %v365, %v295
          %457 = vset.pattern.permute.xlu0 0
          %458 = vperm.xlu0 %457, %v380
          %v459 = vpop.permute.xlu0 %458
          %462 = vset.pattern.permute.xlu0 0
          %463 = vperm.xlu0 %462, %v381
          %v464 = vpop.permute.xlu0 %463
          %467 = vset.pattern.permute.xlu0 0
          %468 = vperm.xlu0 %467, %v382
          %v469 = vpop.permute.xlu0 %468
          %472 = vset.pattern.permute.xlu0 0
          %473 = vperm.xlu0 %472, %v383
          %v474 = vpop.permute.xlu0 %473
          %477 = vset.pattern.permute.xlu0 0
          %478 = vperm.xlu0 %477, %v384
          %v479 = vpop.permute.xlu0 %478
          %482 = vset.pattern.permute.xlu0 0
          %483 = vperm.xlu0 %482, %v385
          %v484 = vpop.permute.xlu0 %483
          %487 = vset.pattern.permute.xlu0 0
          %488 = vperm.xlu0 %487, %v386
          %v489 = vpop.permute.xlu0 %488
          %492 = vset.pattern.permute.xlu0 0
          %493 = vperm.xlu0 %492, %v387
          %v494 = vpop.permute.xlu0 %493
          %497 = vset.pattern.permute.xlu0 0
          %498 = vperm.xlu0 %497, %v388
          %v499 = vpop.permute.xlu0 %498
          %502 = vset.pattern.permute.xlu0 0
          %503 = vperm.xlu0 %502, %v389
          %v504 = vpop.permute.xlu0 %503
          %507 = vset.pattern.permute.xlu0 0
          %508 = vperm.xlu0 %507, %v390
          %v509 = vpop.permute.xlu0 %508
          %512 = vset.pattern.permute.xlu0 0
          %513 = vperm.xlu0 %512, %v391
          %v514 = vpop.permute.xlu0 %513
          %517 = vset.pattern.permute.xlu0 0
          %518 = vperm.xlu0 %517, %v392
          %v519 = vpop.permute.xlu0 %518
          %522 = vset.pattern.permute.xlu0 0
          %523 = vperm.xlu0 %522, %v393
          %v524 = vpop.permute.xlu0 %523
          %527 = vset.pattern.permute.xlu0 0
          %528 = vperm.xlu0 %527, %v394
          %v529 = vpop.permute.xlu0 %528
          %532 = vset.pattern.permute.xlu0 0
          %533 = vperm.xlu0 %532, %v395
          %v534 = vpop.permute.xlu0 %533
          %v540 = vunpack.c.l.b16 %v452
          %v541 = vunpack.c.l.b16 %v453
          %v542 = vunpack.c.l.b16 %v454
          %v543 = vunpack.c.l.b16 %v455
          %v544 = vpack.c.b16 %v541, %v540
          %v545 = vpack.c.b16 %v543, %v542
          %548 = vxpose.xlu0.c.b16.start [1/8] %v544, 128
          %549 = vxpose.xlu0.c.b16.cont [2/8] %v545, 128
          %550 = vxpose.xlu0.c.b16.cont [3/8] 0, 128
          %551 = vxpose.xlu0.c.b16.cont [4/8] 0, 128
          %552 = vxpose.xlu0.c.b16.cont [5/8] 0, 128
          %553 = vxpose.xlu0.c.b16.cont [6/8] 0, 128
          %554 = vxpose.xlu0.c.b16.cont [7/8] 0, 128
          %555 = vxpose.xlu0.c.b16.end [8/8] 0, 128
          %v556 = vpop.trf.xlu0
          %v557 = vpop.trf.xlu0
          %v558 = vpop.trf.xlu0
          %v559 = vpop.trf.xlu0
          %v560 = vpop.trf.xlu0
          %v561 = vpop.trf.xlu0
          %v562 = vpop.trf.xlu0
          %v563 = vpop.trf.xlu0
          %v568 = vunpack.c.l.b16 %v448
          %v569 = vunpack.c.l.b16 %v449
          %v570 = vunpack.c.l.b16 %v450
          %v571 = vunpack.c.l.b16 %v451
          %v572 = vpack.c.b16 %v569, %v568
          %v573 = vpack.c.b16 %v571, %v570
          %vm576 = vcmask 261120
          %v578 = vsel %vm576, %v556, 0
          %v581 = vsel %vm576, %v557, 0
          %v584 = vsel %vm576, %v558, 0
          %v587 = vsel %vm576, %v559, 0
          %v590 = vsel %vm576, %v560, 0
          %v593 = vsel %vm576, %v561, 0
          %v596 = vsel %vm576, %v562, 0
          %v599 = vsel %vm576, %v563, 0
          %601 = vmatprep.subr.bf16.mxu0 0
          %602 = vmatpush1.bf16.msra.mxu0 0
          %603 = vmatprep.subr.bf16.mxu0 0
          %604 = vmatpush1.bf16.msra.mxu0 0
          %605 = vmatprep.subr.bf16.mxu0 0
          %606 = vmatpush1.bf16.msra.mxu0 0
          %607 = vmatprep.subr.bf16.mxu0 0
          %608 = vmatpush1.bf16.msra.mxu0 0
          %609 = vmatprep.subr.bf16.mxu0 0
          %610 = vmatpush1.bf16.msra.mxu0 0
          %611 = vmatprep.subr.bf16.mxu0 0
          %612 = vmatpush1.bf16.msra.mxu0 0
          %613 = vmatprep.subr.bf16.mxu0 0
          %614 = vmatpush1.bf16.msra.mxu0 %v573
          %615 = vmatprep.subr.bf16.mxu0 0
          %616 = vmatpush1.bf16.msra.mxu0 %v572
          %617 = vmatprep.subr.bf16.mxu0 0
          %618 = vmatpush2.bf16.msra.mxu0 0
          %619 = vmatprep.subr.bf16.mxu0 0
          %620 = vmatpush2.bf16.msra.mxu0 0
          %621 = vmatprep.subr.bf16.mxu0 0
          %622 = vmatpush2.bf16.msra.mxu0 0
          %623 = vmatprep.subr.bf16.mxu0 0
          %624 = vmatpush2.bf16.msra.mxu0 0
          %625 = vmatprep.subr.bf16.mxu0 0
          %626 = vmatpush2.bf16.msra.mxu0 0
          %627 = vmatprep.subr.bf16.mxu0 0
          %628 = vmatpush2.bf16.msra.mxu0 0
          %629 = vmatprep.subr.bf16.mxu0 0
          %630 = vmatpush2.bf16.msra.mxu0 0
          %631 = vmatprep.subr.bf16.mxu0 0
          %632 = vmatpush2.bf16.msra.mxu0 0
          %633 = vmatprep.mubr.bf16.mxu0 0
          %634 = vmatmul.mubr.bf16.gmra.mxu0 %v578
          %v635 = vpop.f32.mrf.mxu0
          %v636 = vadd.f32 %v459, %v635
          %v637 = vpop.f32.mrf.mxu0
          %v638 = vpop.f32.mrf.mxu0
          %v639 = vadd.f32 %v464, %v638
          %v640 = vpop.f32.mrf.mxu0
          %641 = vmatprep.mubr.bf16.mxu0 0
          %642 = vmatmul.mubr.bf16.gmra.mxu0 %v581
          %v643 = vpop.f32.mrf.mxu0
          %v644 = vadd.f32 %v469, %v643
          %v645 = vpop.f32.mrf.mxu0
          %v646 = vpop.f32.mrf.mxu0
          %v647 = vadd.f32 %v474, %v646
          %v648 = vpop.f32.mrf.mxu0
          %649 = vmatprep.mubr.bf16.mxu0 0
          %650 = vmatmul.mubr.bf16.gmra.mxu0 %v584
          %v651 = vpop.f32.mrf.mxu0
          %v652 = vadd.f32 %v479, %v651
          %v653 = vpop.f32.mrf.mxu0
          %v654 = vpop.f32.mrf.mxu0
          %v655 = vadd.f32 %v484, %v654
          %v656 = vpop.f32.mrf.mxu0
          %657 = vmatprep.mubr.bf16.mxu0 0
          %658 = vmatmul.mubr.bf16.gmra.mxu0 %v587
          %v659 = vpop.f32.mrf.mxu0
          %v660 = vadd.f32 %v489, %v659
          %v661 = vpop.f32.mrf.mxu0
          %v662 = vpop.f32.mrf.mxu0
          %v663 = vadd.f32 %v494, %v662
          %v664 = vpop.f32.mrf.mxu0
          %665 = vmatprep.mubr.bf16.mxu0 0
          %666 = vmatmul.mubr.bf16.gmra.mxu0 %v590
          %v667 = vpop.f32.mrf.mxu0
          %v668 = vadd.f32 %v499, %v667
          %v669 = vpop.f32.mrf.mxu0
          %v670 = vpop.f32.mrf.mxu0
          %v671 = vadd.f32 %v504, %v670
          %v672 = vpop.f32.mrf.mxu0
          %673 = vmatprep.mubr.bf16.mxu0 0
          %674 = vmatmul.mubr.bf16.gmra.mxu0 %v593
          %v675 = vpop.f32.mrf.mxu0
          %v676 = vadd.f32 %v509, %v675
          %v677 = vpop.f32.mrf.mxu0
          %v678 = vpop.f32.mrf.mxu0
          %v679 = vadd.f32 %v514, %v678
          %v680 = vpop.f32.mrf.mxu0
          %681 = vmatprep.mubr.bf16.mxu0 0
          %682 = vmatmul.mubr.bf16.gmra.mxu0 %v596
          %v683 = vpop.f32.mrf.mxu0
          %v684 = vadd.f32 %v519, %v683
          %v685 = vpop.f32.mrf.mxu0
          %v686 = vpop.f32.mrf.mxu0
          %v687 = vadd.f32 %v524, %v686
          %v688 = vpop.f32.mrf.mxu0
          %689 = vmatprep.mubr.bf16.mxu0 0
          %690 = vmatmul.mubr.bf16.gmra.mxu0 %v599
          %v691 = vpop.f32.mrf.mxu0
          %v692 = vadd.f32 %v529, %v691
          %v693 = vpop.f32.mrf.mxu0
          %v694 = vpop.f32.mrf.mxu0
          %v695 = vadd.f32 %v534, %v694
          %v696 = vpop.f32.mrf.mxu0
          %697 = vdwg.mxu0
          %v698 = vadd.f32 %v636, %v331
          %v699 = vadd.f32 %v639, %v332
          %v700 = vadd.f32 %v644, %v333
          %v701 = vadd.f32 %v647, %v334
          %v702 = vadd.f32 %v652, %v335
          %v703 = vadd.f32 %v655, %v336
          %v704 = vadd.f32 %v660, %v337
          %v705 = vadd.f32 %v663, %v338
          %v706 = vadd.f32 %v668, %v339
          %v707 = vadd.f32 %v671, %v340
          %v708 = vadd.f32 %v676, %v341
          %v709 = vadd.f32 %v679, %v342
          %v710 = vadd.f32 %v684, %v343
          %v711 = vadd.f32 %v687, %v344
          %v712 = vadd.f32 %v692, %v345
          %v713 = vadd.f32 %v695, %v346
          %v714 = vmax.f32 %v698, %v702
          %v715 = vmax.f32 %v699, %v703
          %v716 = vmax.f32 %v700, %v704
          %v717 = vmax.f32 %v701, %v705
          %v718 = vmax.f32 %v714, %v706
          %v719 = vmax.f32 %v715, %v707
          %v720 = vmax.f32 %v716, %v708
          %v721 = vmax.f32 %v717, %v709
          %v722 = vmax.f32 %v718, %v710
          %v723 = vmax.f32 %v719, %v711
          %v724 = vmax.f32 %v720, %v712
          %v725 = vmax.f32 %v721, %v713
          %v726 = vmax.f32 %v722, %v723
          %v727 = vmax.f32 %v724, %v725
          %v728 = vmax.f32 %v726, %v727
          %v729 = vrot.slane %v728, 4
          %v730 = vmax.f32 %v728, %v729
          %v731 = vrot.slane %v730, 2
          %v732 = vmax.f32 %v730, %v731
          %v733 = vrot.slane %v732, 1
          %v734 = vmax.f32 %v732, %v733
          %v735 = vsub.f32 %v698, %v734
          %v736 = vsub.f32 %v699, %v734
          %v737 = vsub.f32 %v700, %v734
          %v738 = vsub.f32 %v701, %v734
          %v739 = vsub.f32 %v702, %v734
          %v740 = vsub.f32 %v703, %v734
          %v741 = vsub.f32 %v704, %v734
          %v742 = vsub.f32 %v705, %v734
          %v743 = vsub.f32 %v706, %v734
          %v744 = vsub.f32 %v707, %v734
          %v745 = vsub.f32 %v708, %v734
          %v746 = vsub.f32 %v709, %v734
          %v747 = vsub.f32 %v710, %v734
          %v748 = vsub.f32 %v711, %v734
          %v749 = vsub.f32 %v712, %v734
          %v750 = vsub.f32 %v713, %v734
          %v751 = vmul.f32 %v735, 1.442695
          %v752 = vpow.pop %v751
          %v753 = vmul.f32 %v736, 1.442695
          %v754 = vpow.pop %v753
          %v755 = vmul.f32 %v737, 1.442695
          %v756 = vpow.pop %v755
          %v757 = vmul.f32 %v738, 1.442695
          %v758 = vpow.pop %v757
          %v759 = vmul.f32 %v739, 1.442695
          %v760 = vpow.pop %v759
          %v761 = vmul.f32 %v740, 1.442695
          %v762 = vpow.pop %v761
          %v763 = vmul.f32 %v741, 1.442695
          %v764 = vpow.pop %v763
          %v765 = vmul.f32 %v742, 1.442695
          %v766 = vpow.pop %v765
          %v767 = vmul.f32 %v743, 1.442695
          %v768 = vpow.pop %v767
          %v769 = vmul.f32 %v744, 1.442695
          %v770 = vpow.pop %v769
          %v771 = vmul.f32 %v745, 1.442695
          %v772 = vpow.pop %v771
          %v773 = vmul.f32 %v746, 1.442695
          %v774 = vpow.pop %v773
          %v775 = vmul.f32 %v747, 1.442695
          %v776 = vpow.pop %v775
          %v777 = vmul.f32 %v748, 1.442695
          %v778 = vpow.pop %v777
          %v779 = vmul.f32 %v749, 1.442695
          %v780 = vpow.pop %v779
          %v781 = vmul.f32 %v750, 1.442695
          %v782 = vpow.pop %v781
          %v783 = vadd.f32 %v752, %v754
          %v784 = vadd.f32 %v783, %v756
          %v785 = vadd.f32 %v784, %v758
          %v786 = vadd.f32 %v785, %v760
          %v787 = vadd.f32 %v786, %v762
          %v788 = vadd.f32 %v787, %v764
          %v789 = vadd.f32 %v788, %v766
          %v790 = vadd.f32 %v789, %v768
          %v791 = vadd.f32 %v790, %v770
          %v792 = vadd.f32 %v791, %v772
          %v793 = vadd.f32 %v792, %v774
          %v794 = vadd.f32 %v793, %v776
          %v795 = vadd.f32 %v794, %v778
          %v796 = vadd.f32 %v795, %v780
          %v797 = vadd.f32 %v796, %v782
          %v798 = vrot.slane %v797, 4
          %v799 = vadd.f32 %v797, %v798
          %v800 = vrot.slane %v799, 2
          %v801 = vadd.f32 %v799, %v800
          %v802 = vrot.slane %v801, 1
          %v803 = vadd.f32 %v801, %v802
          %v804 = vpack.c.bf16 %v754, %v752
          %v805 = vpack.c.bf16 %v758, %v756
          %v806 = vpack.c.bf16 %v762, %v760
          %v807 = vpack.c.bf16 %v766, %v764
          %v808 = vpack.c.bf16 %v770, %v768
          %v809 = vpack.c.bf16 %v774, %v772
          %v810 = vpack.c.bf16 %v778, %v776
          %v811 = vpack.c.bf16 %v782, %v780
          %v816 = vunpack.c.l.b16 %v368
          %v817 = vunpack.c.l.b16 %v369
          %v818 = vunpack.c.l.b16 %v370
          %v819 = vunpack.c.l.b16 %v371
          %v820 = vpack.c.b16 %v817, %v816
          %v821 = vpack.c.b16 %v819, %v818
          %824 = vmatprep.subr.bf16.mxu0 0
          %825 = vmatpush1.bf16.msra.mxu0 %v811
          %826 = vmatprep.subr.bf16.mxu0 0
          %827 = vmatpush1.bf16.msra.mxu0 %v810
          %828 = vmatprep.subr.bf16.mxu0 0
          %829 = vmatpush1.bf16.msra.mxu0 %v809
          %830 = vmatprep.subr.bf16.mxu0 0
          %831 = vmatpush1.bf16.msra.mxu0 %v808
          %832 = vmatprep.subr.bf16.mxu0 0
          %833 = vmatpush1.bf16.msra.mxu0 %v807
          %834 = vmatprep.subr.bf16.mxu0 0
          %835 = vmatpush1.bf16.msra.mxu0 %v806
          %836 = vmatprep.subr.bf16.mxu0 0
          %837 = vmatpush1.bf16.msra.mxu0 %v805
          %838 = vmatprep.subr.bf16.mxu0 0
          %839 = vmatpush1.bf16.msra.mxu0 %v804
          %840 = vmatprep.subr.bf16.mxu0 0
          %841 = vmatpush2.bf16.msra.mxu0 0
          %842 = vmatprep.subr.bf16.mxu0 0
          %843 = vmatpush2.bf16.msra.mxu0 0
          %844 = vmatprep.subr.bf16.mxu0 0
          %845 = vmatpush2.bf16.msra.mxu0 0
          %846 = vmatprep.subr.bf16.mxu0 0
          %847 = vmatpush2.bf16.msra.mxu0 0
          %848 = vmatprep.subr.bf16.mxu0 0
          %849 = vmatpush2.bf16.msra.mxu0 0
          %850 = vmatprep.subr.bf16.mxu0 0
          %851 = vmatpush2.bf16.msra.mxu0 0
          %852 = vmatprep.subr.bf16.mxu0 0
          %853 = vmatpush2.bf16.msra.mxu0 0
          %854 = vmatprep.subr.bf16.mxu0 0
          %855 = vmatpush2.bf16.msra.mxu0 0
          %856 = vmatprep.mubr.bf16.mxu0 0
          %857 = vmatmul.mubr.bf16.gmra.mxu0 %v820
          %v858 = vpop.f32.mrf.mxu0
          %v859 = vadd.f32 0.0, %v858
          %v860 = vpop.f32.mrf.mxu0
          %v861 = vpop.f32.mrf.mxu0
          %v862 = vadd.f32 0.0, %v861
          %v863 = vpop.f32.mrf.mxu0
          %864 = vmatprep.mubr.bf16.mxu0 0
          %865 = vmatmul.mubr.bf16.gmra.mxu0 %v821
          %v866 = vpop.f32.mrf.mxu0
          %v867 = vadd.f32 0.0, %v866
          %v868 = vpop.f32.mrf.mxu0
          %v869 = vpop.f32.mrf.mxu0
          %v870 = vadd.f32 0.0, %v869
          %v871 = vpop.f32.mrf.mxu0
          %872 = vdwg.mxu0
          %v873 = vrcp.pop %v803
          %v874 = vmul.f32 %v859, %v873
          %v875 = vmul.f32 %v862, %v873
          %v876 = vmul.f32 %v867, %v873
          %v877 = vmul.f32 %v870, %v873
          %s878 = smul.u32 %s348, 32
          %s879 = scalar_lea.vmem %s274, %s878 [#allocation2]
          %880 = vst [vmem:[%s879] sm:$0xff] %v874
          %881 = vst [vmem:[%s879 + $0x8] sm:$0xff] %v875
          %882 = vst [vmem:[%s879 + $0x10] sm:$0xff] %v876
          %883 = vst [vmem:[%s879 + $0x18] sm:$0xff] %v877
        $region49: #{tpu_custom_call.1} parent=43 // loop_footer
          %s352 = sadd.s32 1, %s348
        $region50: #{tpu_custom_call.1} parent=43 // loop_footer_branch
          %347 = sbr.rel target = $region46
        $region51: #{tpu_custom_call.1} parent=43 // loop_exit
          _
        %s884 = sand.u32 %s169, 1
        %s885 = scalar_lea.sflag [#allocation3], %s884
        %s886 = sand.u32 %s169, 1
        %s887 = smul.addr %s886, 128
        %s888 = scalar_lea.vmem [#allocation2], %s887
        // Predicated region
        $region52: #{tpu_custom_call.1} parent=43 // pred_check
          %p889 = pneg %p179
        $region53: #{tpu_custom_call.1} parent=43 // pred_check_branch
          %891 = sbr.rel (%p889) target = $region55
        $region54: #{tpu_custom_call.1} parent=43 // pred_region
          %s893 = ssub.s32 2048, 2048
          %894 = vsyncadd %s885, %s893
          %s895 = smul.addr %s20, 16
          %s896 = smul.addr %s895, 128
          %s897 = scalar_lea.hbm %s6, %s896
          %s898 = sshll.u32 %s888, 4
          %s899 = int_to_ptr.vmem [resolvable:$true] %s898
          %904 = dma.vmem_to_hbm [thread:$0]  %s899, 2048, %s897, %s885, 128, 128, 8
        $region55: #{tpu_custom_call.1} parent=43 // pred_fallthru
          _
      $region44: #{tpu_custom_call.1} parent=5 // pred_fallthru
        _
      %p905 = scmp.le.s32.totalorder 2, %s15
      // Predicated region
      $region56: #{tpu_custom_call.1} parent=5 // pred_check
        %p906 = pneg %p905
      $region57: #{tpu_custom_call.1} parent=5 // pred_check_branch
        %908 = sbr.rel (%p906) target = $region59
      $region58: #{tpu_custom_call.1} parent=5 // pred_region
        %s909 = ssub.s32 %s15, 2
        // Predicated region
        $region60: #{tpu_custom_call.1} parent=58 // pred_check
          %p910 = pneg %p185
        $region61: #{tpu_custom_call.1} parent=58 // pred_check_branch
          %912 = sbr.rel (%p910) target = $region63
        $region62: #{tpu_custom_call.1} parent=58 // pred_region
          %s913 = sand.u32 %s170, 1
          %s914 = scalar_lea.sflag [#allocation3], %s913
          %s915 = sand.u32 %s170, 1
          %s916 = smul.addr %s915, 128
          %s917 = scalar_lea.vmem [#allocation2], %s916
          %918 = dma.done %s914, 2048
        $region63: #{tpu_custom_call.1} parent=58 // pred_fallthru
          _
      $region59: #{tpu_custom_call.1} parent=5 // pred_fallthru
        _
    $region6: #{tpu_custom_call.1} parent=1 // loop_footer
      %s19 = sadd.s32 1, %s15
    $region7: #{tpu_custom_call.1} parent=1 // loop_footer_branch
      %14 = sbr.rel target = $region3
    $region8: #{tpu_custom_call.1} parent=1 // loop_exit
      _
    %919 = vsyncpa [#allocation3], 1
    %s920 = scalar_lea.sflag [#allocation3], 1
    %921 = vsyncpa %s920, 1

</llo_original>
